<compile_context>
chip_gen: v7x
topology: tpu7x:2x2x1
jax: 0.10.0
libtpu: 0.0.40
codegen_flags: <defaults>
</compile_context>

<pallas_src>
import functools

import jax
import jax.numpy as jnp
from jax import lax
from jax.experimental import pallas as pl
from jax.experimental.pallas import tpu as pltpu


def _round_up(x, m):
    return (x + m - 1) // m * m


def _cdiv(a, b):
    return -(-a // b)


def _pick_target_tile():
    # v5e/v6e have 128 MiB VMEM (bigger row tiles amortize per-step overhead),
    # v7x has 64 MiB (keep ~1024-row tiles; per-step footprint stays < ~6 MiB).
    try:
        vmem = int(getattr(pltpu.get_tpu_info(), "vmem_capacity_bytes", 0))
    except Exception:  # pragma: no cover - info query is best-effort
        vmem = 0
    return 2048 if vmem >= (96 << 20) else 1024


_TARGET_TILE = _pick_target_tile()

_INV_SQRT2 = 0.7071067811865476


# --------------------------- in-kernel helpers -------------------------------

def _erf_poly(x):
    """Abramowitz & Stegun 7.1.26 erf approximation (|abs err| <= 1.5e-7).

    Uses only abs/div/exp so it lowers cleanly in Mosaic (exp -> EUP slot).
    """
    a1, a2, a3, a4, a5 = (0.254829592, -0.284496736, 1.421413741,
                          -1.453152027, 1.061405429)
    p = 0.3275911
    ax = jnp.abs(x)
    t = 1.0 / (1.0 + p * ax)
    poly = ((((a5 * t + a4) * t + a3) * t + a2) * t + a1) * t
    y = 1.0 - poly * jnp.exp(-ax * ax)
    return jnp.where(x < 0, -y, y)


def _gelu_in_kernel(x):
    return 0.5 * x * (1.0 + _erf_poly(x * _INV_SQRT2))


# ----------------------------- Pallas kernels --------------------------------

def _matmul_kernel(a_ref, b_ref, bias_ref, o_ref, *, act, act_cols):
    y = (jnp.dot(a_ref[...], b_ref[...], preferred_element_type=jnp.float32)
         + bias_ref[...])
    if act == "gelu":
        g = _gelu_in_kernel(y)
        if act_cols is None:
            y = g
        else:  # merged heads: GELU only on the first act_cols output columns
            col = lax.broadcasted_iota(jnp.int32, y.shape, 1)
            y = jnp.where(col < act_cols, g, y)
    o_ref[...] = y


def pallas_matmul(a, prep, *, act="none", act_cols=None):
    """(M, K) bf16 @ prepped (K, Np) bf16 weight + f32 bias (+ fused act)."""
    M, K = a.shape
    w_p, b_p = prep["w"], prep["b"]
    Kw, Np = w_p.shape
    assert K == Kw, (K, Kw)

    num_tiles = max(1, _cdiv(M, _TARGET_TILE))
    if num_tiles == 1 and M >= 16:
        num_tiles = 2                      # keep both v7x TensorCores busy
    # Prefer a tile count whose 8-aligned tile size divides M exactly so the
    # M-tail pad copy of the im2col matrix is skipped.
    exact = None
    for cand in range(max(2, num_tiles - 1), 2 * num_tiles + 1):
        if M % cand == 0 and (M // cand) % 8 == 0:
            exact = cand
            break
    if exact is not None:
        num_tiles, tm, Mp = exact, M // exact, M
    else:
        tm = _round_up(_cdiv(M, num_tiles), 8)
        Mp = tm * num_tiles
        a = jnp.pad(a, ((0, Mp - M), (0, 0)))
    a = a.astype(jnp.bfloat16)             # no-op when caller already cast

    out = pl.pallas_call(
        functools.partial(_matmul_kernel, act=act, act_cols=act_cols),
        out_shape=jax.ShapeDtypeStruct((Mp, Np), jnp.float32),
        grid=(num_tiles,),
        in_specs=[
            pl.BlockSpec((tm, K), lambda i: (i, 0)),
            pl.BlockSpec((K, Np), lambda i: (0, 0)),
            pl.BlockSpec((1, Np), lambda i: (0, 0)),
        ],
        out_specs=pl.BlockSpec((tm, Np), lambda i: (i, 0)),
        compiler_params=pltpu.CompilerParams(
            dimension_semantics=("parallel",)),
    )(a, w_p, b_p)
    return out[:M, :prep["n"]]


def _instance_norm_kernel(x_ref, o_ref, *, act):
    x = x_ref[...]                                     # (1, H*W, C)
    inv_n = 1.0 / x.shape[1]
    mean = jnp.sum(x, axis=1, keepdims=True) * inv_n
    d = x - mean
    var = jnp.sum(d * d, axis=1, keepdims=True) * inv_n
    y = d * lax.rsqrt(var + 1e-5)
    if act == "gelu":
        y = _gelu_in_kernel(y)
    o_ref[...] = y


def instance_norm(x, act="none"):
    """nn.InstanceNorm2d(affine=False, eps=1e-5) on NHWC (+ fused GELU)."""
    n, h, w, c = x.shape
    xr = x.reshape(n, h * w, c).astype(jnp.float32)
    out = pl.pallas_call(
        functools.partial(_instance_norm_kernel, act=act),
        out_shape=jax.ShapeDtypeStruct((n, h * w, c), jnp.float32),
        grid=(n,),
        in_specs=[pl.BlockSpec((1, h * w, c), lambda i: (i, 0, 0))],
        out_specs=pl.BlockSpec((1, h * w, c), lambda i: (i, 0, 0)),
        compiler_params=pltpu.CompilerParams(
            dimension_semantics=("parallel",)),
    )(xr)
    return out.reshape(n, h, w, c)


# ----------------------------- conv wrappers ---------------------------------

def _im2col_nhwc(xb, kh, kw, stride, dilation, ho, wo):
    """NHWC im2col: concat k*k shifted slices along the lane (channel) axis."""
    if kh == 1 and kw == 1 and stride == 1:
        return xb.reshape(-1, xb.shape[-1])
    taps = []
    for i in range(kh):
        for j in range(kw):
            hs, ws = i * dilation, j * dilation
            taps.append(xb[:, hs: hs + stride * (ho - 1) + 1: stride,
                           ws: ws + stride * (wo - 1) + 1: stride, :])
    cols = jnp.concatenate(taps, axis=-1)              # (N, Ho, Wo, kh*kw*Cin)
    return cols.reshape(-1, cols.shape[-1])


def conv2d_p(x, prep, *, act="none", act_cols=None):
    """PyTorch-semantics Conv2d on NHWC via im2col + fused Pallas GEMM."""
    n = x.shape[0]
    kh, kw = prep["kh"], prep["kw"]
    stride, padding, dilation = prep["stride"], prep["padding"], prep["dilation"]
    xb = x.astype(jnp.bfloat16)        # cast once; halves im2col HBM traffic
    if padding > 0:
        mode = "reflect" if prep["pad_mode"] == "reflect" else "constant"
        xb = jnp.pad(xb, ((0, 0), (padding, padding), (padding, padding),
                          (0, 0)), mode=mode)
    hp, wp = xb.shape[1], xb.shape[2]
    ho = (hp - dilation * (kh - 1) - 1) // stride + 1
    wo = (wp - dilation * (kw - 1) - 1) // stride + 1
    cols = _im2col_nhwc(xb, kh, kw, stride, dilation, ho, wo)
    out = pallas_matmul(cols, prep, act=act, act_cols=act_cols)
    return out.reshape(n, ho, wo, -1)


def conv_transpose2d_p(x, prep):
    """ConvTranspose2d(k=4, s=2, p=1) on NHWC via a 4-phase sub-pixel GEMM."""
    n, h, w, _ = x.shape
    cout = prep["cout"]
    xb = jnp.pad(x.astype(jnp.bfloat16), ((0, 0), (1, 1), (1, 1), (0, 0)))
    cols = _im2col_nhwc(xb, 3, 3, 1, 1, h, w)          # (N*h*w, 9*Cin)
    out = pallas_matmul(cols, prep)                    # (N*h*w, 4*Cout)
    out = out.reshape(n, h, w, 2, 2, cout)             # (n, y, x, py, px, co)
    out = out.transpose(0, 1, 3, 2, 4, 5)              # (n, y, py, x, px, co)
    return out.reshape(n, 2 * h, 2 * w, cout)


# ------------------------- weight preparation (one-time) ---------------------

def _prep_gemm(wmat, bias):
    """(K, Nout) weight, (Nout,) bias -> bf16 weight, lane-padded to Np."""
    K, N = wmat.shape
    Np = _round_up(N, 128)
    w_p = jnp.zeros((K, Np), jnp.bfloat16).at[:, :N].set(
        wmat.astype(jnp.bfloat16))
    b_p = jnp.zeros((1, Np), jnp.float32).at[0, :N].set(
        bias.astype(jnp.float32))
    return {"w": w_p, "b": b_p, "n": int(N)}


def _conv_wmat(w):
    """torch (Cout, Cin, kh, kw) -> (kh*kw*Cin, Cout), matching NHWC im2col."""
    cout, cin, kh, kw = w.shape
    return jnp.transpose(w, (2, 3, 1, 0)).reshape(kh * kw * cin, cout)


def _prep_conv_merge(ws_and_bs, *, stride=1, padding=0, dilation=1,
                     pad_mode="reflect"):
    """Merge convs sharing one im2col into a single GEMM (concat along N)."""
    kh, kw = int(ws_and_bs[0][0].shape[2]), int(ws_and_bs[0][0].shape[3])
    wmat = jnp.concatenate([_conv_wmat(w) for w, _ in ws_and_bs], axis=1)
    bias = jnp.concatenate([b for _, b in ws_and_bs])
    prep = _prep_gemm(wmat, bias)
    prep.update(dict(kh=kh, kw=kw, stride=stride, padding=padding,
                     dilation=dilation, pad_mode=pad_mode))
    return prep


def _prep_conv(w, b, *, stride=1, padding=0, dilation=1, pad_mode="reflect"):
    return _prep_conv_merge([(w, b)], stride=stride, padding=padding,
                            dilation=dilation, pad_mode=pad_mode)


def _prep_deconv(w, b):
    """ConvTranspose2d(k=4, s=2, p=1) -> 4-phase weights over a 3x3 im2col.

    out[n, 2y+py, 2x+px, co] = b[co] + sum_{ki in {py,py+1}, kj in {px,px+1}}
        xpad[n, y+ki, x+kj, :] . w[:, co, 3-2*ki+py, 3-2*kj+px]
    where xpad is the input zero-padded by 1 (verified vs lax in __main__).
    """
    cin, cout, kh, kw = (int(s) for s in w.shape)
    assert kh == 4 and kw == 4
    Wm = jnp.zeros((9 * cin, 4 * cout), jnp.float32)
    for py in range(2):
        for px in range(2):
            col0 = (py * 2 + px) * cout
            for ki in (py, py + 1):
                for kj in (px, px + 1):
                    ky = 3 - 2 * ki + py
                    kx = 3 - 2 * kj + px
                    r0 = (ki * 3 + kj) * cin
                    Wm = Wm.at[r0:r0 + cin, col0:col0 + cout].set(
                        w[:, :, ky, kx].astype(jnp.float32))
    prep = _prep_gemm(Wm, jnp.tile(b.astype(jnp.float32), 4))
    prep["cout"] = cout
    return prep


# --------------------------------- modules ------------------------------------

def gelu_exact(x):
    # exact erf-GELU (torch.nn.GELU default); tiny tensors, plain JAX.
    return 0.5 * x * (1.0 + lax.erf(x * _INV_SQRT2))


def calayer(x, p):
    # Tiny FCs on (N, C): launch overhead >> math, keep in plain JAX.
    y = jnp.mean(x, axis=(1, 2))                      # (N, C)
    y = gelu_exact(y @ p["w1"].T + p["b1"])
    y = jax.nn.sigmoid(y @ p["w2"].T + p["b2"])
    return x * y[:, None, None, :]


def adcarb(x, p):
    # d1 (dilation=1) and dest share the reflect-pad-1 3x3 im2col -> one GEMM
    # with GELU fused onto the first d1_cout output columns only.
    c1 = p["d1_cout"]
    d1_dest = conv2d_p(x, p["d1_dest"], act="gelu", act_cols=c1)
    x_di1 = d1_dest[..., :c1]
    x_dest = d1_dest[..., c1:]
    x_di4 = conv2d_p(x, p["d4"], act="gelu")
    x_di16 = conv2d_p(x, p["d16"], act="gelu")
    mask = jax.nn.sigmoid(calayer(x_dest, p["ca"]))
    x_c = conv2d_p(jnp.concatenate([x_di1, x_di4, x_di16], axis=-1), p["fuse"])
    x_c = instance_norm(x_c, act="gelu")
    x_c = instance_norm(conv2d_p(x_c, p["c3"]))
    x_c = x * (1.0 - mask) + x_c * mask
    x_c = calayer(x_c, p["ca"])
    return x_c + x


def attention_stem(x, p):
    # x: (N, H, W, C). Matches the PyTorch AttentionStem: q on x, k/v on the
    # zero-padded x (border positions see the conv bias, as in the reference),
    # 3x3 unfold, softmax over m for the mixture embedding, softmax over taps.
    ks, pad, m = p["ks"], p["pad"], p["m"]
    n, h, w, c = x.shape
    xp = jnp.pad(x, ((0, 0), (pad, pad), (pad, pad), (0, 0)))
    q = conv2d_p(x, p["q"])                            # (N, H, W, C)
    kv = conv2d_p(xp, p["kv"])                         # merged key + m values
    k = kv[..., :c]
    v = kv[..., c:].reshape(n, h + 2 * pad, w + 2 * pad, m, c)

    def unfold(t):
        sl = []
        for i in range(ks):
            for j in range(ks):
                sl.append(t[:, i:i + h, j:j + w])
        return jnp.stack(sl, axis=3)                   # (N, H, W, ks*ks, ...)

    k_out = unfold(k)                                  # (N, H, W, 9, C)
    v_out = unfold(v)                                  # (N, H, W, 9, m, C)

    la = p["emb_mix"] @ p["emb_a"]                     # (m, ks)
    lb = p["emb_mix"] @ p["emb_b"]                     # (m, ks)
    emb = la[:, :, None] + lb[:, None, :]              # (m, ks, ks)
    emb = jax.nn.softmax(emb.reshape(m, -1), axis=0)   # (m, 9)
    v_sum = jnp.einsum("nhwkmc,mk->nhwkc", v_out, emb)

    # The groups reshape in the reference is elementwise-transparent here.
    att = jax.nn.softmax(q[:, :, :, None, :] * k_out, axis=3)
    return jnp.sum(att * v_sum, axis=3)                # (N, H, W, C)


def encoder_fwd(x, p, key):
    h = conv2d_p(x, p["c1"])
    h = conv2d_p(h, p["c2"])
    h = conv2d_p(h, p["c3"])
    for bp in p["blocks"]:
        h = adcarb(h, bp)
    mulv = conv2d_p(h, p["mu_lv"])                     # merged mu / log_var
    z_dim = mulv.shape[-1] // 2
    mu, log_var = mulv[..., :z_dim], mulv[..., z_dim:]
    std = jnp.exp(0.5 * log_var)
    eps = jax.random.normal(key, std.shape, std.dtype)
    z = mu + eps * std
    return z, h, mu, log_var


def decoder_fwd(z, p):
    h = z
    for bp in p["blocks"]:
        h = adcarb(h, bp)
    h = conv_transpose2d_p(h, p["d3"])
    h = conv_transpose2d_p(h, p["d4"])
    return h


def cam_frn_forward(pp, x, cam, masked_input, mask, key):
    # Model I/O stays NCHW (PyTorch layout); compute is NHWC end-to-end.
    to_nhwc = lambda t: jnp.transpose(t, (0, 2, 3, 1))
    to_nchw = lambda t: jnp.transpose(t, (0, 3, 1, 2))
    x_h = to_nhwc(x)
    gen_input = jnp.concatenate(
        [x_h, x_h * to_nhwc(cam), to_nhwc(masked_input), to_nhwc(mask)],
        axis=-1)
    z, _f_x, mu, log_var = encoder_fwd(gen_input, pp["encoder"], key)
    z_att = attention_stem(z, pp["att"])
    fuse = conv2d_p(jnp.concatenate([z, z_att], axis=-1), pp["ff"])
    dec = decoder_fwd(fuse, pp["decoder"])
    out = conv2d_p(dec, pp["rm"]) + x_h
    final = jax.nn.sigmoid(out)
    return to_nchw(final), to_nchw(z), to_nchw(mu), to_nchw(log_var)


# ------------------------------ parameter init --------------------------------

class _KeyGen:
    def __init__(self, seed):
        self._key = jax.random.PRNGKey(seed)

    def __call__(self):
        self._key, sub = jax.random.split(self._key)
        return sub


def _conv_init(kg, cout, cin, k, std=0.02):
    w = std * jax.random.normal(kg(), (cout, cin, k, k), jnp.float32)
    return w, jnp.zeros((cout,), jnp.float32)


def _init_calayer(kg, c):
    w1, b1 = _conv_init(kg, c // 8, c, 1)
    w2, b2 = _conv_init(kg, c, c // 8, 1)
    return dict(w1=w1, b1=b1, w2=w2, b2=b2)


def _init_adcarb(kg, dim):
    p = {}
    p["d1_w"], p["d1_b"] = _conv_init(kg, dim // 16, dim, 3)
    p["d4_w"], p["d4_b"] = _conv_init(kg, dim // 16, dim, 3)
    p["d16_w"], p["d16_b"] = _conv_init(kg, dim // 16, dim, 3)
    p["c3_w"], p["c3_b"] = _conv_init(kg, dim, dim, 3)
    p["fuse_w"], p["fuse_b"] = _conv_init(kg, dim, 3 * (dim // 16), 3)
    p["dest_w"], p["dest_b"] = _conv_init(kg, dim, dim, 3)
    p["ca"] = _init_calayer(kg, dim)
    return p


def _init_attention(kg, c, groups=8, m=4, ks=3):
    std = (2.0 / c) ** 0.5          # kaiming_normal(fan_out) for a 1x1 conv
    p = {}
    p["q_w"] = std * jax.random.normal(kg(), (c, c, 1, 1), jnp.float32)
    p["q_b"] = jnp.zeros((c,), jnp.float32)
    p["k_w"] = std * jax.random.normal(kg(), (c, c, 1, 1), jnp.float32)
    p["k_b"] = jnp.zeros((c,), jnp.float32)
    p["v_w"] = std * jax.random.normal(kg(), (m, c, c, 1, 1), jnp.float32)
    p["v_b"] = jnp.zeros((m, c), jnp.float32)
    p["emb_a"] = jax.random.normal(kg(), (c // groups, ks), jnp.float32)
    p["emb_b"] = jax.random.normal(kg(), (c // groups, ks), jnp.float32)
    p["emb_mix"] = jax.random.normal(kg(), (m, c // groups), jnp.float32)
    return p


def init_cam_frn(seed, ch, blocks, dim, z_dim):
    kg = _KeyGen(seed)
    enc = {}
    enc["c1_w"], enc["c1_b"] = _conv_init(kg, dim, ch + 3 + 3 + 1, 3)
    enc["c2_w"], enc["c2_b"] = _conv_init(kg, dim, dim, 4)
    enc["c3_w"], enc["c3_b"] = _conv_init(kg, dim, dim, 4)
    enc["blocks"] = [_init_adcarb(kg, dim) for _ in range(blocks)]
    enc["mu_w"], enc["mu_b"] = _conv_init(kg, z_dim, dim, 3)
    enc["lv_w"], enc["lv_b"] = _conv_init(kg, z_dim, dim, 3)
    dec = {}
    dec["blocks"] = [_init_adcarb(kg, z_dim) for _ in range(blocks)]
    dec["d3_w"] = 0.02 * jax.random.normal(kg(), (z_dim, dim, 4, 4), jnp.float32)
    dec["d3_b"] = jnp.zeros((dim,), jnp.float32)
    dec["d4_w"] = 0.02 * jax.random.normal(kg(), (dim, dim, 4, 4), jnp.float32)
    dec["d4_b"] = jnp.zeros((dim,), jnp.float32)
    ff_w, ff_b = _conv_init(kg, z_dim, 2 * z_dim, 3)
    rm_w, rm_b = _conv_init(kg, 3, dim, 3)
    att = _init_attention(kg, z_dim)
    return dict(encoder=enc, decoder=dec, att=att,
                ff_w=ff_w, ff_b=ff_b, rm_w=rm_w, rm_b=rm_b)


def _prep_adcarb(bp):
    ca = bp["ca"]
    return {
        "d1_dest": _prep_conv_merge(
            [(bp["d1_w"], bp["d1_b"]), (bp["dest_w"], bp["dest_b"])],
            padding=1, pad_mode="reflect"),
        "d1_cout": int(bp["d1_w"].shape[0]),
        "d4": _prep_conv(bp["d4_w"], bp["d4_b"], padding=4, dilation=4,
                         pad_mode="reflect"),
        "d16": _prep_conv(bp["d16_w"], bp["d16_b"], padding=16, dilation=16,
                          pad_mode="reflect"),
        "fuse": _prep_conv(bp["fuse_w"], bp["fuse_b"], padding=1,
                           pad_mode="reflect"),
        "c3": _prep_conv(bp["c3_w"], bp["c3_b"], padding=1,
                         pad_mode="reflect"),
        "ca": {"w1": ca["w1"].reshape(ca["w1"].shape[0], ca["w1"].shape[1]),
               "b1": ca["b1"],
               "w2": ca["w2"].reshape(ca["w2"].shape[0], ca["w2"].shape[1]),
               "b2": ca["b2"]},
    }


def prepare_params(raw):
    """One-time conversion of PyTorch-layout weights into padded GEMM layout."""
    enc = raw["encoder"]
    p_enc = {
        "c1": _prep_conv(enc["c1_w"], enc["c1_b"], padding=1,
                         pad_mode="reflect"),
        "c2": _prep_conv(enc["c2_w"], enc["c2_b"], stride=2, padding=1,
                         pad_mode="reflect"),
        "c3": _prep_conv(enc["c3_w"], enc["c3_b"], stride=2, padding=1,
                         pad_mode="reflect"),
        "blocks": [_prep_adcarb(bp) for bp in enc["blocks"]],
        "mu_lv": _prep_conv_merge(
            [(enc["mu_w"], enc["mu_b"]), (enc["lv_w"], enc["lv_b"])],
            padding=1, pad_mode="zeros"),
    }
    dec = raw["decoder"]
    p_dec = {
        "blocks": [_prep_adcarb(bp) for bp in dec["blocks"]],
        "d3": _prep_deconv(dec["d3_w"], dec["d3_b"]),
        "d4": _prep_deconv(dec["d4_w"], dec["d4_b"]),
    }
    att = raw["att"]
    m = int(att["v_w"].shape[0])
    p_att = {
        "q": _prep_conv(att["q_w"], att["q_b"], padding=0, pad_mode="zeros"),
        "kv": _prep_conv_merge(
            [(att["k_w"], att["k_b"])]
            + [(att["v_w"][i], att["v_b"][i]) for i in range(m)],
            padding=0, pad_mode="zeros"),
        "emb_a": att["emb_a"], "emb_b": att["emb_b"],
        "emb_mix": att["emb_mix"],
        "m": m, "ks": 3, "pad": 1,
    }
    return {
        "encoder": p_enc, "decoder": p_dec, "att": p_att,
        "ff": _prep_conv(raw["ff_w"], raw["ff_b"], padding=1,
                         pad_mode="reflect"),
        "rm": _prep_conv(raw["rm_w"], raw["rm_b"], padding=1,
                         pad_mode="reflect"),
    }


# --------------------------- numerical self-checks ----------------------------

def _ref_conv_nhwc(x, w, b, stride, padding, dilation, pad_mode):
    if padding > 0:
        mode = "reflect" if pad_mode == "reflect" else "constant"
        x = jnp.pad(x, ((0, 0), (padding, padding), (padding, padding),
                        (0, 0)), mode=mode)
    rhs = jnp.transpose(w, (2, 3, 1, 0))               # HWIO
    out = lax.conv_general_dilated(
        x, rhs, window_strides=(stride, stride), padding="VALID",
        rhs_dilation=(dilation, dilation),
        dimension_numbers=("NHWC", "HWIO", "NHWC"),
        precision=lax.Precision.HIGHEST)
    return out + b


def _ref_deconv_nhwc(x, w, b):
    # torch ConvTranspose2d(k=4, s=2, p=1) == lhs-dilated conv w/ flipped kernel
    rhs = jnp.transpose(jnp.flip(w, (2, 3)), (2, 3, 0, 1))
    out = lax.conv_general_dilated(
        x, rhs, window_strides=(1, 1), padding=((2, 2), (2, 2)),
        lhs_dilation=(2, 2), dimension_numbers=("NHWC", "HWIO", "NHWC"),
        precision=lax.Precision.HIGHEST)
    return out + b


def _self_check():
    k = jax.random.split(jax.random.PRNGKey(42), 6)
    x = jax.random.uniform(k[0], (1, 9, 9, 8), jnp.float32)
    b = 0.1 * jax.random.normal(k[2], (16,), jnp.float32)

    w3 = 0.05 * jax.random.normal(k[1], (16, 8, 3, 3), jnp.float32)
    got = conv2d_p(x, _prep_conv(w3, b, padding=1, pad_mode="reflect"))
    ref = _ref_conv_nhwc(x, w3, b, 1, 1, 1, "reflect")
    assert float(jnp.max(jnp.abs(got - ref))) < 1e-2, "3x3 conv mismatch"

    w4 = 0.05 * jax.random.normal(k[3], (16, 8, 4, 4), jnp.float32)
    got = conv2d_p(x, _prep_conv(w4, b, stride=2, padding=1,
                                 pad_mode="reflect"))
    ref = _ref_conv_nhwc(x, w4, b, 2, 1, 1, "reflect")
    assert float(jnp.max(jnp.abs(got - ref))) < 1e-2, "4x4/s2 conv mismatch"

    wd = 0.05 * jax.random.normal(k[4], (8, 16, 4, 4), jnp.float32)
    bd = 0.1 * jax.random.normal(k[5], (16,), jnp.float32)
    xd = jax.random.uniform(k[0], (1, 7, 7, 8), jnp.float32)
    got = conv_transpose2d_p(xd, _prep_deconv(wd, bd))
    ref = _ref_deconv_nhwc(xd, wd, bd)
    assert float(jnp.max(jnp.abs(got - ref))) < 1e-2, "deconv mismatch"


# ------------------------------------ main -------------------------------------

if __name__ == "__main__":
    _self_check()

    # Spatial must be >= 68: the 17x17 latent is the smallest size allowing
    # ADCARB's reflect padding of 16 (same constraint as PyTorch reflect pad).
    ch, blocks, dim, z_dim = 3, 1, 32, 16
    N, H, W = 2, 68, 68

    raw_params = init_cam_frn(0, ch, blocks, dim, z_dim)
    pp = prepare_params(raw_params)       # weight prep hoisted out of forward

    key = jax.random.PRNGKey(0)
    kx, kc, km, kk, keps = jax.random.split(key, 5)
    x = jax.random.uniform(kx, (N, ch, H, W), jnp.float32)
    cam = jax.random.uniform(kc, (N, 3, H, W), jnp.float32)
    masked_input = jax.random.uniform(km, (N, 3, H, W), jnp.float32)
    mask = (jax.random.uniform(kk, (N, 1, H, W)) > 0.5).astype(jnp.float32)

    fwd = jax.jit(lambda xi, ci, mi, ki, ei:
                  cam_frn_forward(pp, xi, ci, mi, ki, ei))
    final_recon, encoding, mu, log_var = fwd(x, cam, masked_input, mask, keps)
    jax.block_until_ready(final_recon)

    assert final_recon.shape == (N, 3, H, W)
    assert encoding.shape == (N, z_dim, H // 4, W // 4)
    assert mu.shape == (N, z_dim, H // 4, W // 4)
    assert log_var.shape == (N, z_dim, H // 4, W // 4)
    assert bool(jnp.all(jnp.isfinite(final_recon)))
    print("KERNEL_OK")
</pallas_src>

<mosaic_0001>
module attributes {stable_mosaic.version = 11 : i64} {
  func.func @_matmul_kernel(%arg0: i32, %arg1: memref<48x72xbf16, #tpu.memory_space<vmem>>, %arg2: memref<72x128xbf16, #tpu.memory_space<vmem>>, %arg3: memref<1x128xf32, #tpu.memory_space<vmem>>, %arg4: memref<48x128xf32, #tpu.memory_space<vmem>>) attributes {dimension_semantics = [#tpu.dimension_semantics<parallel>], iteration_bounds = array<i64: 2>, scalar_prefetch = 0 : i64, scratch_operands = 0 : i64, tpu.core_type = #tpu.core_type<tc>, window_params = [{transform_indices = @transform_0, window_bounds = array<i64: 48, 72>}, {pipeline_mode = #tpu.pipeline_mode<synchronous>, transform_indices = @transform_1, window_bounds = array<i64: 72, 128>}, {pipeline_mode = #tpu.pipeline_mode<synchronous>, transform_indices = @transform_2, window_bounds = array<i64: 1, 128>}, {transform_indices = @transform_3, window_bounds = array<i64: 48, 128>}]} {
    %c0 = arith.constant 0 : index
    %c0_0 = arith.constant 0 : index
    %0 = vector.load %arg1[%c0, %c0_0] : memref<48x72xbf16, #tpu.memory_space<vmem>>, vector<48x72xbf16>
    %c0_1 = arith.constant 0 : index
    %c0_2 = arith.constant 0 : index
    %1 = vector.load %arg2[%c0_1, %c0_2] : memref<72x128xbf16, #tpu.memory_space<vmem>>, vector<72x128xbf16>
    %cst = arith.constant dense<0.000000e+00> : vector<48x128xf32>
    %2 = tpu.matmul %0, %1, %cst {dimension_numbers = #tpu.dot_dimension_numbers<[1], [0], [0], [1], [0, 0, 1, 1], [], []>} : vector<48x72xbf16>, vector<72x128xbf16>, vector<48x128xf32> -> vector<48x128xf32>
    %c0_3 = arith.constant 0 : index
    %c0_4 = arith.constant 0 : index
    %3 = vector.load %arg3[%c0_3, %c0_4] : memref<1x128xf32, #tpu.memory_space<vmem>>, vector<1x128xf32>
    %4 = vector.broadcast %3 : vector<1x128xf32> to vector<48x128xf32>
    %5 = arith.addf %2, %4 : vector<48x128xf32>
    %c0_5 = arith.constant 0 : index
    %c0_6 = arith.constant 0 : index
    %6 = vector.load %arg4[%c0_5, %c0_6] : memref<48x128xf32, #tpu.memory_space<vmem>>, vector<48x128xf32>
    tpu.vector_store %arg4[%c0_5, %c0_6], %5 {strides = array<i32>} : memref<48x128xf32, #tpu.memory_space<vmem>>, vector<48x128xf32>,
    return
  }
  func.func @transform_0(%arg0: i32) -> (i32, i32) {
    %c0_i32 = arith.constant 0 : i32
    %c0_i32_0 = arith.constant 0 : i32
    return %arg0, %c0_i32 : i32, i32
  }
  func.func @transform_1(%arg0: i32) -> (i32, i32) {
    %c0_i32 = arith.constant 0 : i32
    %c0_i32_0 = arith.constant 0 : i32
    %c0_i32_1 = arith.constant 0 : i32
    return %c0_i32, %c0_i32_0 : i32, i32
  }
  func.func @transform_2(%arg0: i32) -> (i32, i32) {
    %c0_i32 = arith.constant 0 : i32
    %c0_i32_0 = arith.constant 0 : i32
    %c0_i32_1 = arith.constant 0 : i32
    return %c0_i32, %c0_i32_0 : i32, i32
  }
  func.func @transform_3(%arg0: i32) -> (i32, i32) {
    %c0_i32 = arith.constant 0 : i32
    %c0_i32_0 = arith.constant 0 : i32
    return %arg0, %c0_i32 : i32, i32
  }
}

</mosaic_0001>

<llo_original>
// kernel: tpu_custom_call.1
$region0: #{tpu_custom_call.1}
  #allocation0 [shape = 'u32[]', space=smem, size = 0x4, offset = 0x4, fixed_abs, tag = 'smem constant byte address 0x4 - core index']
  #allocation1 [shape = 'u32[144,128]{1,0:T(1,128)}', space=vmem, size = 0x12000, scoped, tag = 'internal scratch']
  %s0 = inlined_call_operand.vmem [shape: bf16[96,72], index: 0, kind: input, shape index: {}]
  %s1 = inlined_call_operand.vmem [shape: bf16[72,128], index: 1, kind: input, shape index: {}]
  %s2 = inlined_call_operand.vmem [shape: f32[1,128], index: 2, kind: input, shape index: {}]
  %s3 = inlined_call_operand.hbm [shape: f32[96,128], index: 3, kind: output, shape index: {}]
  %s4 = sld [smem:[#allocation0]]
  $region45: #{tpu_custom_call.1} parent=0
    _
  %s6 = ssub.s32 1, %s4
  %s7 = scalar_select 0, %s6, %s4
  $region1: #{tpu_custom_call.1} parent=0
    #allocation2 [shape = 'u8[49152]{0}', space=vmem, size = 0xc000, scoped, tag = 'output window, operand 0']
    #allocation3 [shape = 's32[2]{0}', space=sflag, size = 0x8, scoped, tag = 'scoped memory for tpu_custom_call.1']
    %8 = vsyncpa [#allocation3], 0
    %s9 = scalar_lea.sflag [#allocation3], 1
    %10 = vsyncpa %s9, 0
    loop: start=0, step=1, limit=4
    $region2: #{tpu_custom_call.1} parent=1 // loop_pre_header
      _
    $region3: #{tpu_custom_call.1} parent=1 // loop_header
      %s12 = sphi 0, %s16
      %p13 = scmp.ge.s32.totalorder %s12, 4
      %s22 = sphi 0, %s24
      %s25 = sphi 0, %s22
      %s26 = sphi 0, %s25
      %s42 = sphi 0, %s26
      %s46 = sphi 0, %s46
      %s48 = sphi 0, %s46
      %s49 = sphi 0, %s48
      %s63 = sphi 0, %s49
      %s67 = sphi 0, %s67
      %s69 = sphi 0, %s67
      %s70 = sphi 0, %s69
      %s84 = sphi 0, %s70
      %s90 = sphi 0, %s92
      %s93 = sphi 0, %s90
      %s94 = sphi 0, %s93
      %s110 = sphi 0, %s94
    $region4: #{tpu_custom_call.1} parent=1 // loop_header_branch
      %15 = sbr.rel (%p13) target = $region8
    $region5: #{tpu_custom_call.1} parent=1 // loop_body
      %s17 = ssub.s32 %s12, 1
      %s18 = ssub.s32 %s12, 2
      %s19 = sadd.s32 %s12, 1
      %s20 = ssub.s32 %s12, %s19
      %p21 = scmp.eq.s32.totalorder %s20, 0
      %s23 = sadd.s32 %s22, 1
      %s24 = scalar_select %p21, %s22, %s23
      %p27 = pneg %p21
      %p28 = scmp.eq.s32.totalorder %s12, 1
      %p29 = por %p27, %p28
      %p30 = scmp.ne.s32.totalorder %s22, %s25
      %p31 = scmp.eq.s32.totalorder %s12, 0
      %p32 = por %p30, %p31
      %p33 = scmp.ne.s32.totalorder %s22, %s25
      %p34 = scmp.eq.s32.totalorder %s17, 1
      %p35 = por %p33, %p34
      %p36 = scmp.ne.s32.totalorder %s25, %s26
      %p37 = scmp.eq.s32.totalorder %s17, 0
      %p38 = por %p36, %p37
      %p39 = scmp.ne.s32.totalorder %s25, %s26
      %p40 = scmp.eq.s32.totalorder %s18, 1
      %p41 = por %p39, %p40
      %p43 = scmp.ne.s32.totalorder %s26, %s42
      %p44 = scmp.eq.s32.totalorder %s18, 0
      %p45 = por %p43, %p44
      %s47 = sadd.s32 %s46, 1
      %p50 = scmp.eq.s32.totalorder %s12, 1
      %p51 = scmp.ne.s32.totalorder %s46, %s48
      %p52 = scmp.eq.s32.totalorder %s12, 0
      %p53 = por %p51, %p52
      %p54 = scmp.ne.s32.totalorder %s46, %s48
      %p55 = scmp.eq.s32.totalorder %s17, 1
      %p56 = por %p54, %p55
      %p57 = scmp.ne.s32.totalorder %s48, %s49
      %p58 = scmp.eq.s32.totalorder %s17, 0
      %p59 = por %p57, %p58
      %p60 = scmp.ne.s32.totalorder %s48, %s49
      %p61 = scmp.eq.s32.totalorder %s18, 1
      %p62 = por %p60, %p61
      %p64 = scmp.ne.s32.totalorder %s49, %s63
      %p65 = scmp.eq.s32.totalorder %s18, 0
      %p66 = por %p64, %p65
      %s68 = sadd.s32 %s67, 1
      %p71 = scmp.eq.s32.totalorder %s12, 1
      %p72 = scmp.ne.s32.totalorder %s67, %s69
      %p73 = scmp.eq.s32.totalorder %s12, 0
      %p74 = por %p72, %p73
      %p75 = scmp.ne.s32.totalorder %s67, %s69
      %p76 = scmp.eq.s32.totalorder %s17, 1
      %p77 = por %p75, %p76
      %p78 = scmp.ne.s32.totalorder %s69, %s70
      %p79 = scmp.eq.s32.totalorder %s17, 0
      %p80 = por %p78, %p79
      %p81 = scmp.ne.s32.totalorder %s69, %s70
      %p82 = scmp.eq.s32.totalorder %s18, 1
      %p83 = por %p81, %p82
      %p85 = scmp.ne.s32.totalorder %s70, %s84
      %p86 = scmp.eq.s32.totalorder %s18, 0
      %p87 = por %p85, %p86
      %s88 = ssub.s32 %s12, %s19
      %p89 = scmp.eq.s32.totalorder %s88, 0
      %s91 = sadd.s32 %s90, 1
      %s92 = scalar_select %p89, %s90, %s91
      %p95 = pneg %p89
      %p96 = scmp.eq.s32.totalorder %s12, 1
      %p97 = por %p95, %p96
      %p98 = scmp.ne.s32.totalorder %s90, %s93
      %p99 = scmp.eq.s32.totalorder %s12, 0
      %p100 = por %p98, %p99
      %p101 = scmp.ne.s32.totalorder %s90, %s93
      %p102 = scmp.eq.s32.totalorder %s17, 1
      %p103 = por %p101, %p102
      %p104 = scmp.ne.s32.totalorder %s93, %s94
      %p105 = scmp.eq.s32.totalorder %s17, 0
      %p106 = por %p104, %p105
      %p107 = scmp.ne.s32.totalorder %s93, %s94
      %p108 = scmp.eq.s32.totalorder %s18, 1
      %p109 = por %p107, %p108
      %p111 = scmp.ne.s32.totalorder %s94, %s110
      %p112 = scmp.eq.s32.totalorder %s18, 0
      %p113 = por %p111, %p112
      %p114 = scmp.le.s32.totalorder 1, %s12
      %p115 = scmp.lt.s32.totalorder %s12, 3
      %p116 = pnand %p114, %p115
      %p117 = pneg %p116
      // Predicated region
      $region9: #{tpu_custom_call.1} parent=5 // pred_check
        _
      $region10: #{tpu_custom_call.1} parent=5 // pred_check_branch
        %119 = sbr.rel (%p116) target = $region12
      $region11: #{tpu_custom_call.1} parent=5 // pred_region
        %s120 = ssub.s32 %s12, 1
        // Predicated region
        $region13: #{tpu_custom_call.1} parent=11 // pred_check
          %p121 = pneg %p59
        $region14: #{tpu_custom_call.1} parent=11 // pred_check_branch
          %123 = sbr.rel (%p121) target = $region16
        $region15: #{tpu_custom_call.1} parent=11 // pred_region
          _
        $region16: #{tpu_custom_call.1} parent=11 // pred_fallthru
          _
        // Predicated region
        $region17: #{tpu_custom_call.1} parent=11 // pred_check
          %p124 = pneg %p80
        $region18: #{tpu_custom_call.1} parent=11 // pred_check_branch
          %126 = sbr.rel (%p124) target = $region20
        $region19: #{tpu_custom_call.1} parent=11 // pred_region
          _
        $region20: #{tpu_custom_call.1} parent=11 // pred_fallthru
          _
      $region12: #{tpu_custom_call.1} parent=5 // pred_fallthru
        _
      %p127 = scmp.lt.s32.totalorder %s12, 2
      // Predicated region
      $region21: #{tpu_custom_call.1} parent=5 // pred_check
        %p128 = pneg %p127
      $region22: #{tpu_custom_call.1} parent=5 // pred_check_branch
        %130 = sbr.rel (%p128) target = $region24
      $region23: #{tpu_custom_call.1} parent=5 // pred_region
        // Predicated region
        $region25: #{tpu_custom_call.1} parent=23 // pred_check
          %p131 = pneg %p32
        $region26: #{tpu_custom_call.1} parent=23 // pred_check_branch
          %133 = sbr.rel (%p131) target = $region28
        $region27: #{tpu_custom_call.1} parent=23 // pred_region
          %s134 = smul.u32 6, %s12
          %p135 = scmp.lt.s32.totalorder %s134, 11
          %s136 = scalar_select %p135, %s134, 11
          %s137 = smul.addr %s136, 4
          %s138 = scalar_lea.vmem %s0, %s137
          %s139 = smul.u32 6, %s12
        $region28: #{tpu_custom_call.1} parent=23 // pred_fallthru
          _
      $region24: #{tpu_custom_call.1} parent=5 // pred_fallthru
        _
      %p140 = scmp.le.s32.totalorder 1, %s12
      %p141 = scmp.lt.s32.totalorder %s12, 3
      %p142 = pnand %p140, %p141
      %p143 = pneg %p142
      // Predicated region
      $region29: #{tpu_custom_call.1} parent=5 // pred_check
        _
      $region30: #{tpu_custom_call.1} parent=5 // pred_check_branch
        %145 = sbr.rel (%p142) target = $region32
      $region31: #{tpu_custom_call.1} parent=5 // pred_region
        %s146 = ssub.s32 %s12, 1
        %s147 = smul.u32 6, %s17
        %p148 = scmp.lt.s32.totalorder %s147, 11
        %s149 = scalar_select %p148, %s147, 11
        %s150 = smul.addr %s149, 4
        %s151 = scalar_lea.vmem %s0, %s150
        %p152 = pneg %p38
        %p153 = pneg %p35
        %p154 = pneg %p59
        %p155 = pneg %p56
        %p156 = pneg %p80
        %p157 = pneg %p77
        %p158 = pneg %p106
        %p159 = pneg %p103
        %s160 = sand.u32 %s93, 1
        %s161 = scalar_lea.sflag [#allocation3], %s160
        %s162 = sand.u32 %s93, 1
        %s163 = smul.addr %s162, 48
        %s164 = scalar_lea.vmem [#allocation2], %s163
        %s165 = smul.u32 6, %s17
        %p166 = scmp.lt.s32.totalorder %s165, 11
        %s167 = scalar_select %p166, %s165, 11
        %s168 = smul.addr %s167, 4
        %s169 = scalar_lea.vmem %s0, %s168
        %s170 = smul.u32 6, %s17
        %s171 = smul.u32 6, %s17
        %v173 = vld [vmem:[%s169] sm:$0xf]
        %v174 = vld [vmem:[%s169 + $0x4] sm:$0xf]
        %v175 = vld [vmem:[%s169 + $0x8] sm:$0xf]
        %v176 = vld [vmem:[%s169 + $0xc] sm:$0xf]
        %v177 = vld [vmem:[%s169 + $0x10] sm:$0xf]
        %v178 = vld [vmem:[%s169 + $0x14] sm:$0xf]
        %v179 = vld [vmem:[%s1] sm:$0xf]
        %v180 = vld [vmem:[%s1 + $0x4] sm:$0xf]
        %v181 = vld [vmem:[%s1 + $0x8] sm:$0xf]
        %v182 = vld [vmem:[%s1 + $0xc] sm:$0xf]
        %v183 = vld [vmem:[%s1 + $0x10] sm:$0xf]
        %v184 = vld [vmem:[%s1 + $0x14] sm:$0xf]
        %v185 = vld [vmem:[%s1 + $0x18] sm:$0xf]
        %v186 = vld [vmem:[%s1 + $0x1c] sm:$0xf]
        %v187 = vld [vmem:[%s1 + $0x20] sm:$0xf]
        %v188 = vld [vmem:[%s2] sm:$0x1]
        %v190 = vlaneseq
        %v191 = vshrl.u32 %v190, 7
        %v192 = vsub.s32 0, %v191
        %v193 = vrot.slane %v188, %v192
        %v201 = vunpack.c.l.b16 %v173
        %v202 = vunpack.c.l.b16 %v174
        %v203 = vunpack.c.l.b16 %v175
        %v204 = vunpack.c.l.b16 %v176
        %v205 = vunpack.c.l.b16 %v177
        %v206 = vunpack.c.l.b16 %v178
        %v207 = vpack.c.b16 %v202, %v201
        %v208 = vpack.c.b16 %v204, %v203
        %v209 = vpack.c.b16 %v206, %v205
        %v219 = vunpack.c.l.b16 %v179
        %v220 = vunpack.c.l.b16 %v180
        %v221 = vunpack.c.l.b16 %v181
        %v222 = vunpack.c.l.b16 %v182
        %v223 = vunpack.c.l.b16 %v183
        %v224 = vunpack.c.l.b16 %v184
        %v225 = vunpack.c.l.b16 %v185
        %v226 = vunpack.c.l.b16 %v186
        %v227 = vunpack.c.l.b16 %v187
        %v228 = vpack.c.b16 %v220, %v219
        %v229 = vpack.c.b16 %v222, %v221
        %v230 = vpack.c.b16 %v224, %v223
        %v231 = vpack.c.b16 %v226, %v225
        %v232 = vpack.c.b16 %v227, %v227
        %vm237 = vcmask 588800
        %v239 = vsel %vm237, %v207, 0
        %v242 = vsel %vm237, %v208, 0
        %v245 = vsel %vm237, %v209, 0
        %vm247 = vcmask 1043456
        %v249 = vsel %vm247, %v232, 0
        %251 = vmatprep.subr.bf16.mxu0 0
        %252 = vmatpush1.bf16.msra.mxu0 %v228
        %253 = vmatprep.subr.bf16.mxu0 0
        %254 = vmatpush1.bf16.msra.mxu0 %v229
        %255 = vmatprep.subr.bf16.mxu0 0
        %256 = vmatpush1.bf16.msra.mxu0 %v230
        %257 = vmatprep.subr.bf16.mxu0 0
        %258 = vmatpush1.bf16.msra.mxu0 %v231
        %259 = vmatprep.subr.bf16.mxu0 0
        %260 = vmatpush1.bf16.msra.mxu0 %v249
        %261 = vmatprep.subr.bf16.mxu0 0
        %262 = vmatpush1.bf16.msra.mxu0 0
        %263 = vmatprep.subr.bf16.mxu0 0
        %264 = vmatpush1.bf16.msra.mxu0 0
        %265 = vmatprep.subr.bf16.mxu0 0
        %266 = vmatpush1.bf16.msra.mxu0 0
        %267 = vmatprep.subr.bf16.mxu0 0
        %268 = vmatpush1.bf16.msra.mxu0 0
        %269 = vmatprep.subr.bf16.mxu0 0
        %270 = vmatpush1.bf16.msra.mxu0 0
        %271 = vmatprep.subr.bf16.mxu0 0
        %272 = vmatpush1.bf16.msra.mxu0 0
        %273 = vmatprep.subr.bf16.mxu0 0
        %274 = vmatpush1.bf16.msra.mxu0 0
        %275 = vmatprep.subr.bf16.mxu0 0
        %276 = vmatpush1.bf16.msra.mxu0 0
        %277 = vmatprep.subr.bf16.mxu0 0
        %278 = vmatpush1.bf16.msra.mxu0 0
        %279 = vmatprep.subr.bf16.mxu0 0
        %280 = vmatpush1.bf16.msra.mxu0 0
        %281 = vmatprep.subr.bf16.mxu0 0
        %282 = vmatpush1.bf16.msra.mxu0 0
        %283 = vmatprep.mubr.bf16.mxu0 0
        %284 = vmatmul.mubr.bf16.gmra.mrb[0].mxu0 %v239
        %v285 = vpop.f32.mrb[0].mxu0
        %v286 = vadd.f32 %v193, %v285
        %v287 = vpop.f32.mrb[0].mxu0
        %v288 = vpop.f32.mrb[0].mxu0
        %v289 = vadd.f32 %v193, %v288
        %v290 = vpop.f32.mrb[0].mxu0
        %291 = vmatprep.mubr.bf16.mxu0 0
        %292 = vmatmul.mubr.bf16.gmra.mrb[0].mxu0 %v242
        %v293 = vpop.f32.mrb[0].mxu0
        %v294 = vadd.f32 %v193, %v293
        %v295 = vpop.f32.mrb[0].mxu0
        %v296 = vpop.f32.mrb[0].mxu0
        %v297 = vadd.f32 %v193, %v296
        %v298 = vpop.f32.mrb[0].mxu0
        %299 = vmatprep.mubr.bf16.mxu0 0
        %300 = vmatmul.mubr.bf16.gmra.mrb[0].mxu0 %v245
        %v301 = vpop.f32.mrb[0].mxu0
        %v302 = vadd.f32 %v193, %v301
        %v303 = vpop.f32.mrb[0].mxu0
        %v304 = vpop.f32.mrb[0].mxu0
        %v305 = vadd.f32 %v193, %v304
        %v306 = vpop.f32.mrb[0].mxu0
        %307 = vdwg.mxu0
        %308 = vst [vmem:[%s164] sm:$0xff] %v286
        %309 = vst [vmem:[%s164 + $0x8] sm:$0xff] %v289
        %310 = vst [vmem:[%s164 + $0x10] sm:$0xff] %v294
        %311 = vst [vmem:[%s164 + $0x18] sm:$0xff] %v297
        %312 = vst [vmem:[%s164 + $0x20] sm:$0xff] %v302
        %313 = vst [vmem:[%s164 + $0x28] sm:$0xff] %v305
        %s314 = sand.u32 %s93, 1
        %s315 = scalar_lea.sflag [#allocation3], %s314
        %s316 = sand.u32 %s93, 1
        %s317 = smul.addr %s316, 48
        %s318 = scalar_lea.vmem [#allocation2], %s317
        // Predicated region
        $region33: #{tpu_custom_call.1} parent=31 // pred_check
          %p319 = pneg %p103
        $region34: #{tpu_custom_call.1} parent=31 // pred_check_branch
          %321 = sbr.rel (%p319) target = $region36
        $region35: #{tpu_custom_call.1} parent=31 // pred_region
          %s322 = smul.u32 6, %s17
          %s324 = ssub.s32 768, 768
          %325 = vsyncadd %s315, %s324
          %s326 = smul.addr %s322, 128
          %s327 = scalar_lea.hbm %s3, %s326
          %s328 = sshll.u32 %s318, 4
          %s329 = int_to_ptr.vmem [resolvable:$true] %s328
          %334 = dma.vmem_to_hbm [thread:$0]  %s329, 768, %s327, %s315, 128, 128, 8
        $region36: #{tpu_custom_call.1} parent=31 // pred_fallthru
          _
      $region32: #{tpu_custom_call.1} parent=5 // pred_fallthru
        _
      %p335 = scmp.le.s32.totalorder 2, %s12
      // Predicated region
      $region37: #{tpu_custom_call.1} parent=5 // pred_check
        %p336 = pneg %p335
      $region38: #{tpu_custom_call.1} parent=5 // pred_check_branch
        %338 = sbr.rel (%p336) target = $region40
      $region39: #{tpu_custom_call.1} parent=5 // pred_region
        %s339 = ssub.s32 %s12, 2
        // Predicated region
        $region41: #{tpu_custom_call.1} parent=39 // pred_check
          %p340 = pneg %p109
        $region42: #{tpu_custom_call.1} parent=39 // pred_check_branch
          %342 = sbr.rel (%p340) target = $region44
        $region43: #{tpu_custom_call.1} parent=39 // pred_region
          %s343 = sand.u32 %s94, 1
          %s344 = scalar_lea.sflag [#allocation3], %s343
          %s345 = sand.u32 %s94, 1
          %s346 = smul.addr %s345, 48
          %s347 = scalar_lea.vmem [#allocation2], %s346
          %348 = dma.done %s344, 768
        $region44: #{tpu_custom_call.1} parent=39 // pred_fallthru
          _
      $region40: #{tpu_custom_call.1} parent=5 // pred_fallthru
        _
    $region6: #{tpu_custom_call.1} parent=1 // loop_footer
      %s16 = sadd.s32 1, %s12
    $region7: #{tpu_custom_call.1} parent=1 // loop_footer_branch
      %11 = sbr.rel target = $region3
    $region8: #{tpu_custom_call.1} parent=1 // loop_exit
      _
    %349 = vsyncpa [#allocation3], 1
    %s350 = scalar_lea.sflag [#allocation3], 1
    %351 = vsyncpa %s350, 1

</llo_original>
